<compile_context>
chip_gen: v7x
topology: tpu7x:2x2x1
jax: 0.10.0
libtpu: 0.0.40
codegen_flags: <defaults>
</compile_context>

<pallas_src>
import jax
import jax.numpy as jnp
from jax import lax
from jax.experimental import pallas as pl
from jax.experimental.pallas import tpu as pltpu

_LANES = 128
_MAX_TM = 512            # row-tile cap (multiple of 8 / 16 / 32 sublane packing)
_TL_BYTES = 16 * 1024    # byte budget per row per L tile (16 KiB contiguous DMA rows)
_VMEM_LIMIT = 48 << 20   # > v5e's 16 MiB default scoped VMEM, < v7x's 64 MiB physical


def _reduce_identity(dtype):
    dtype = jnp.dtype(dtype)
    if jnp.issubdtype(dtype, jnp.floating):
        return float("-inf")
    if jnp.issubdtype(dtype, jnp.integer):
        return int(jnp.iinfo(dtype).min)
    raise ValueError(f"unsupported dtype for max pooling: {dtype}")


def _round_up(x, m):
    return ((x + m - 1) // m) * m


def _choose_tiles(rows, length, dtype):
    itemsize = jnp.dtype(dtype).itemsize
    sub_mult = {4: 8, 2: 16, 1: 32}.get(itemsize, 8)

    # Row tile (sublane axis). Aim for >= 2 row blocks so both v7x TensorCores
    # get work on the "parallel" axis; a full-dim block is always legal.
    if rows > _MAX_TM:
        tm = _MAX_TM
    else:
        tm = _round_up(-(-rows // 2), sub_mult)
        if tm >= rows:
            tm = rows

    # L tile (lane axis). Dtype-aware cap: constant byte budget per row.
    tl_cap = max(_LANES, ((_TL_BYTES // itemsize) // _LANES) * _LANES)
    if length <= _LANES:
        tl, acc_w = length, length                      # single tiny block, full last dim
    else:
        tl = min(tl_cap, (length // _LANES) * _LANES)   # multiple of 128
        acc_w = _LANES
    return tm, tl, acc_w


def _make_kernel(tl, acc_w, length, init_val):
    n_chunks = tl // acc_w                    # 128-lane chunks per L block
    n_l_blocks = -(-length // tl)             # static number of L blocks
    rem = length - (n_l_blocks - 1) * tl      # valid lanes in the final L block
    need_mask = rem != tl
    n_full = rem // acc_w                     # fully-valid chunks in final block
    n_straddle = rem % acc_w                  # valid lanes in the straddling chunk

    def kernel(x_ref, o_ref, acc_ref):
        k = pl.program_id(1)
        last_k = pl.num_programs(1) - 1

        @pl.when(k == 0)
        def _init():
            # Scratch persists across grid steps: re-init for every row block.
            acc_ref[...] = jnp.full(acc_ref.shape, init_val, acc_ref.dtype)

        def fold_full():
            # Pure elementwise VPU max over static Ref-sliced 128-lane chunks,
            # accumulated straight into the VMEM scratch (low vreg pressure).
            for j in range(n_chunks):
                acc_ref[...] = jnp.maximum(
                    acc_ref[...], x_ref[:, j * acc_w:(j + 1) * acc_w])

        def fold_last():
            # Final L block: only chunks overlapping [0, length). Fully-OOB
            # chunks are skipped; the one straddling chunk is masked against
            # the GLOBAL column index.
            for j in range(n_full):
                acc_ref[...] = jnp.maximum(
                    acc_ref[...], x_ref[:, j * acc_w:(j + 1) * acc_w])
            if n_straddle:
                j0 = n_full
                chunk = x_ref[:, j0 * acc_w:(j0 + 1) * acc_w]
                start = (n_l_blocks - 1) * tl + j0 * acc_w  # static global offset
                col = start + lax.broadcasted_iota(jnp.int32, chunk.shape, 1)
                chunk = jnp.where(col < length, chunk, init_val)
                acc_ref[...] = jnp.maximum(acc_ref[...], chunk)

        if need_mask:
            @pl.when(k != last_k)
            def _hot():
                fold_full()

            @pl.when(k == last_k)
            def _tail():
                fold_last()
        else:
            fold_full()

        @pl.when(k == last_k)
        def _finalize():
            # One cheap cross-lane (XLU) reduce + one width-1 store per row
            # block — negligible vs. the streamed input traffic.
            o_ref[...] = jnp.max(
                acc_ref[...], axis=-1, keepdims=True).astype(o_ref.dtype)

    return kernel


@jax.jit
def global_max_pool1d(x):
    """Equivalent of torch.max_pool1d(x, kernel_size=x.shape[-1]).

    x: (N, C, L) -> (N, C, 1), same dtype.
    """
    n, c, length = x.shape
    rows = n * c
    x2 = x.reshape(rows, length)  # free for NCL-contiguous data; dense sublanes

    tm, tl, acc_w = _choose_tiles(rows, length, x.dtype)
    init_val = _reduce_identity(x.dtype)
    grid = (pl.cdiv(rows, tm), pl.cdiv(length, tl))

    out = pl.pallas_call(
        _make_kernel(tl, acc_w, length, init_val),
        out_shape=jax.ShapeDtypeStruct((rows, 1), x.dtype),
        grid=grid,
        in_specs=[pl.BlockSpec((tm, tl), lambda i, k: (i, k))],
        out_specs=pl.BlockSpec((tm, 1), lambda i, k: (i, 0)),
        scratch_shapes=[pltpu.VMEM((tm, acc_w), x.dtype)],
        compiler_params=pltpu.CompilerParams(
            dimension_semantics=("parallel", "arbitrary"),
            vmem_limit_bytes=_VMEM_LIMIT,
        ),
    )(x2)
    return out.reshape(n, c, 1)


if __name__ == "__main__":
    k1, k2, k3 = jax.random.split(jax.random.PRNGKey(0), 3)

    # Small shape per the module's forward: (batch, channels, length).
    N, C, L = 2, 4, 16
    x = jax.random.normal(k1, (N, C, L), dtype=jnp.float32)
    out = jax.block_until_ready(global_max_pool1d(x))
    ref = jnp.max(x, axis=-1, keepdims=True)
    assert out.shape == (N, C, 1), out.shape
    assert out.dtype == x.dtype
    assert jnp.allclose(out, ref), "mismatch vs reference (small case)"

    # Two row blocks + straddling-chunk masking on the final L block.
    x_mid = jax.random.normal(k2, (2, 8, 300), dtype=jnp.float32)
    out2 = jax.block_until_ready(global_max_pool1d(x_mid))
    assert jnp.allclose(out2, jnp.max(x_mid, axis=-1, keepdims=True)), \
        "mismatch vs reference (tiled case)"

    # Multi-L-block path: full 32-chunk hot loop + (full+straddle) final block.
    x_big = jax.random.normal(k3, (2, 4, 4396), dtype=jnp.float32)
    out3 = jax.block_until_ready(global_max_pool1d(x_big))
    assert jnp.allclose(out3, jnp.max(x_big, axis=-1, keepdims=True)), \
        "mismatch vs reference (multi-block case)"

    print("KERNEL_OK")
</pallas_src>

<mosaic_0001>
module attributes {stable_mosaic.version = 11 : i64} {
  func.func @kernel(%arg0: i32, %arg1: i32, %arg2: memref<8x16xf32, #tpu.memory_space<vmem>>, %arg3: memref<8x1xf32, #tpu.memory_space<vmem>>, %arg4: memref<8x16xf32, #tpu.memory_space<vmem>>) attributes {dimension_semantics = [#tpu.dimension_semantics<parallel>, #tpu.dimension_semantics<arbitrary>], iteration_bounds = array<i64: 1, 1>, scalar_prefetch = 0 : i64, scratch_operands = 1 : i64, tpu.core_type = #tpu.core_type<tc>, window_params = [{transform_indices = @transform_0, window_bounds = array<i64: 8, 16>}, {transform_indices = @transform_1, window_bounds = array<i64: 8, 1>}]} {
    %c0_i32 = arith.constant 0 : i32
    %0 = arith.cmpi eq, %arg1, %c0_i32 : i32
    %1 = arith.extui %0 : i1 to i32
    %c0_i32_0 = arith.constant 0 : i32
    %2 = arith.cmpi ne, %1, %c0_i32_0 : i32
    scf.if %2 {
      %cst = arith.constant 0xFF800000 : f32
      %10 = vector.broadcast %cst : f32 to vector<8x16xf32>
      %c0_8 = arith.constant 0 : index
      %c0_9 = arith.constant 0 : index
      %11 = vector.load %arg4[%c0_8, %c0_9] : memref<8x16xf32, #tpu.memory_space<vmem>>, vector<8x16xf32>
      tpu.vector_store %arg4[%c0_8, %c0_9], %10 {strides = array<i32>} : memref<8x16xf32, #tpu.memory_space<vmem>>, vector<8x16xf32>,
    } else {
    }
    %c0 = arith.constant 0 : index
    %c0_1 = arith.constant 0 : index
    %3 = vector.load %arg4[%c0, %c0_1] : memref<8x16xf32, #tpu.memory_space<vmem>>, vector<8x16xf32>
    %c0_2 = arith.constant 0 : index
    %c0_3 = arith.constant 0 : index
    %4 = vector.load %arg2[%c0_2, %c0_3] : memref<8x16xf32, #tpu.memory_space<vmem>>, vector<8x16xf32>
    %5 = arith.maximumf %3, %4 : vector<8x16xf32>
    %c0_4 = arith.constant 0 : index
    %c0_5 = arith.constant 0 : index
    %6 = vector.load %arg4[%c0_4, %c0_5] : memref<8x16xf32, #tpu.memory_space<vmem>>, vector<8x16xf32>
    tpu.vector_store %arg4[%c0_4, %c0_5], %5 {strides = array<i32>} : memref<8x16xf32, #tpu.memory_space<vmem>>, vector<8x16xf32>,
    %c0_i32_6 = arith.constant 0 : i32
    %7 = arith.cmpi eq, %arg1, %c0_i32_6 : i32
    %8 = arith.extui %7 : i1 to i32
    %c0_i32_7 = arith.constant 0 : i32
    %9 = arith.cmpi ne, %8, %c0_i32_7 : i32
    scf.if %9 {
      %c0_8 = arith.constant 0 : index
      %c0_9 = arith.constant 0 : index
      %10 = vector.load %arg4[%c0_8, %c0_9] : memref<8x16xf32, #tpu.memory_space<vmem>>, vector<8x16xf32>
      %cst = arith.constant dense<0xFF800000> : vector<8xf32>
      %11 = vector.multi_reduction <maximumf>, %10, %cst [1] : vector<8x16xf32> to vector<8xf32>
      %12 = vector.shape_cast %11 : vector<8xf32> to vector<8x1xf32>
      %c0_10 = arith.constant 0 : index
      %c0_11 = arith.constant 0 : index
      %13 = vector.load %arg3[%c0_10, %c0_11] : memref<8x1xf32, #tpu.memory_space<vmem>>, vector<8x1xf32>
      tpu.vector_store %arg3[%c0_10, %c0_11], %12 {strides = array<i32>} : memref<8x1xf32, #tpu.memory_space<vmem>>, vector<8x1xf32>,
    } else {
    }
    return
  }
  func.func @transform_0(%arg0: i32, %arg1: i32) -> (i32, i32) {
    %c0_i32 = arith.constant 0 : i32
    return %arg0, %arg1 : i32, i32
  }
  func.func @transform_1(%arg0: i32, %arg1: i32) -> (i32, i32) {
    %c0_i32 = arith.constant 0 : i32
    %c0_i32_0 = arith.constant 0 : i32
    return %arg0, %c0_i32 : i32, i32
  }
}

</mosaic_0001>

<llo_original>
// kernel: global_max_pool1d.1
$region0: #{global_max_pool1d.1}
  #allocation0 [shape = 'u32[]', space=smem, size = 0x4, offset = 0x4, fixed_abs, tag = 'smem constant byte address 0x4 - core index']
  #allocation1 [shape = 'u32[144,128]{1,0:T(1,128)}', space=vmem, size = 0x12000, scoped, tag = 'internal scratch']
  #allocation2 [shape = 'f32[8,16]{1,0:T(8,128)}', space=vmem, size = 0x1000, scoped, tag = 'scratch operand']
  %s0 = inlined_call_operand.hbm [shape: f32[8,16], index: 0, kind: input, shape index: {}]
  %s1 = inlined_call_operand.vmem [shape: f32[8,1], index: 1, kind: output, shape index: {}]
  %s2 = sld [smem:[#allocation0]]
  $region26: #{global_max_pool1d.1} parent=0
    _
  %s4 = ssub.s32 1, %s2
  %s5 = scalar_select 0, %s4, %s2
  $region1: #{global_max_pool1d.1} parent=0
    #allocation3 [shape = 'u8[4096]{0}', space=vmem, size = 0x1000, scoped, tag = 'input window, operand 0, single buffered']
    #allocation4 [shape = 's32[1]{0}', space=sflag, size = 0x4, scoped, tag = 'scoped memory for global_max_pool1d.1']
    %6 = vsyncpa [#allocation4], 0
    // Predicated region
    $region2: #{global_max_pool1d.1} parent=1 // pred_check
      _
    $region3: #{global_max_pool1d.1} parent=1 // pred_check_branch
      %8 = sbr.rel (0) target = $region5
    $region4: #{global_max_pool1d.1} parent=1 // pred_region
      %s10 = ssub.s32 128, 128
      %11 = vsyncadd [#allocation4], %s10
      %s13 = sshll.u32 [#allocation3], 4
      %s14 = int_to_ptr.vmem [resolvable:$true] %s13
      %16 = dma.hbm_to_vmem [thread:$0]  %s0, 128, %s14, [#allocation4]
    $region5: #{global_max_pool1d.1} parent=1 // pred_fallthru
      _
    // Predicated region
    $region6: #{global_max_pool1d.1} parent=1 // pred_check
      _
    $region7: #{global_max_pool1d.1} parent=1 // pred_check_branch
      %18 = sbr.rel (0) target = $region9
    $region8: #{global_max_pool1d.1} parent=1 // pred_region
      %19 = dma.done [#allocation4], 128
    $region9: #{global_max_pool1d.1} parent=1 // pred_fallthru
      _
    %p20 = scmp.eq.s32.totalorder 0, 0
    // Predicated region
    $region10: #{global_max_pool1d.1} parent=1 // pred_check
      %p21 = pneg %p20
    $region11: #{global_max_pool1d.1} parent=1 // pred_check_branch
      %23 = sbr.rel (%p21) target = $region13
    $region12: #{global_max_pool1d.1} parent=1 // pred_region
      %vm24 = vcmask 130048
      %25 = vst.msk [vmem:[#allocation2] sm:$0xff] %vm24, -inf
    $region13: #{global_max_pool1d.1} parent=1 // pred_fallthru
      _
    %v26 = vld [vmem:[#allocation2] sm:$0xff]
    %v27 = vld [vmem:[#allocation3] sm:$0xff]
    %v28 = vmax.f32 %v26, %v27
    %vm29 = vcmask 130048
    %30 = vst.msk [vmem:[#allocation2] sm:$0xff] %vm29, %v28
    // Predicated region
    $region14: #{global_max_pool1d.1} parent=1 // pred_check
      %p31 = pneg %p20
    $region15: #{global_max_pool1d.1} parent=1 // pred_check_branch
      %33 = sbr.rel (%p31) target = $region17
    $region16: #{global_max_pool1d.1} parent=1 // pred_region
      %v34 = vld [vmem:[#allocation2] sm:$0xff]
      %v35 = vsel %vm29, %v34, -inf
      %36 = vmax.xlane.f32.xlu0 %v35
      %v37 = vpop.xlane.xlu0 %36
      %vm38 = vcmask 7168
      %39 = vst.msk [vmem:[%s1] sm:$0xff] %vm38, %v37
    $region17: #{global_max_pool1d.1} parent=1 // pred_fallthru
      _
    // Predicated region
    $region18: #{global_max_pool1d.1} parent=1 // pred_check
      _
    $region19: #{global_max_pool1d.1} parent=1 // pred_check_branch
      %41 = sbr.rel (0) target = $region21
    $region20: #{global_max_pool1d.1} parent=1 // pred_region
      _
    $region21: #{global_max_pool1d.1} parent=1 // pred_fallthru
      _
    // Predicated region
    $region22: #{global_max_pool1d.1} parent=1 // pred_check
      _
    $region23: #{global_max_pool1d.1} parent=1 // pred_check_branch
      %43 = sbr.rel (0) target = $region25
    $region24: #{global_max_pool1d.1} parent=1 // pred_region
      _
    $region25: #{global_max_pool1d.1} parent=1 // pred_fallthru
      _
    %44 = vsyncpa [#allocation4], 1

</llo_original>
